<compile_context>
chip_gen: v6e
topology: v6e:2x2x1
jax: 0.10.0
libtpu: 0.0.40
codegen_flags: <defaults>
</compile_context>

<pallas_src>
import functools

import jax
import jax.numpy as jnp
from jax.experimental import pallas as pl
from jax.experimental.pallas import tpu as pltpu

LANE = 128
SUBLANE = 8


def _round_up(x, m):
    return (x + m - 1) // m * m


def _cdiv(a, b):
    return (a + b - 1) // b


def _pad_feature_dim(d):
    # <=128 -> one full lane tile; beyond that pad to 256-multiples so the
    # v6e/v7x 2x256x256 MXU tiles are full (harmless on v5e's 4x128x128).
    return LANE if d <= LANE else _round_up(d, 256)


def dnn_kernel(ids_ref, table_ref, wfc_ref, bfc_ref, wout_ref, bout_ref, out_ref):
    # ids_ref  : (TB, S)        int32  token ids for this batch tile
    # table_ref: (V_pad, E_pad) bf16   embedding table (zero-padded, resident)
    # wfc_ref  : (E_pad, H_pad) bf16   fc weight, pre-transposed (in, out)
    # bfc_ref  : (1, H_pad)     f32    fc bias
    # wout_ref : (H_pad, O_pad) bf16   out weight, pre-transposed (in, out)
    # bout_ref : (1, O_pad)     f32    out bias
    # out_ref  : (TB, O_pad)    f32
    tb, seq = ids_ref.shape
    v_pad = table_ref.shape[0]

    ids = ids_ref[...]                                              # (TB, S)
    vocab_ids = jax.lax.broadcasted_iota(jnp.int32, (1, v_pad), 1)  # (1, V_pad)

    # counts[b, v] = #{s : ids[b, s] == v}.  Since the model sums embeddings
    # over the sequence, sum_s table[ids[b, s]] == counts @ table, so the
    # gather + seq-sum collapse to one MXU matmul.  Accumulate the compare
    # masks in int32 (no per-step cast); single cast after the loop.
    counts_i32 = jnp.zeros((tb, v_pad), jnp.int32)
    for s in range(seq):  # seq is small & static -> unrolled VPU compare+add
        tok = ids[:, s:s + 1]                                       # (TB, 1)
        counts_i32 = counts_i32 + (tok == vocab_ids).astype(jnp.int32)

    # Integer counts are exact in bf16 only up to 256; keep f32 for longer seqs.
    counts_dtype = table_ref.dtype if seq <= 256 else jnp.float32
    counts = counts_i32.astype(counts_dtype)

    summed = jnp.dot(counts, table_ref[...],
                     preferred_element_type=jnp.float32)            # (TB, E_pad)
    x = jax.nn.sigmoid(summed)                                      # f32 (EUP)

    h = jnp.dot(x.astype(wfc_ref.dtype), wfc_ref[...],
                preferred_element_type=jnp.float32) + bfc_ref[...]
    h = jax.nn.sigmoid(h)                                           # f32

    o = jnp.dot(h.astype(wout_ref.dtype), wout_ref[...],
                preferred_element_type=jnp.float32) + bout_ref[...]
    out_ref[...] = o.astype(out_ref.dtype)


def prepare_params(embedding_table, w_fc, b_fc, w_out, b_out,
                   *, compute_dtype=jnp.bfloat16):
    """One-time pad + cast of all parameters (hoisted out of the per-call path).

    Zero padding keeps the math exact: sigmoid(0)=0.5 in padded columns is
    annihilated by the zero-padded weight rows downstream.
    """
    V, E = embedding_table.shape
    H = w_fc.shape[0]
    O = w_out.shape[0]

    V_pad = _round_up(V, LANE)
    E_pad = _pad_feature_dim(E)
    H_pad = _pad_feature_dim(H)
    O_pad = _round_up(O, LANE)   # lane-dense, unmasked output stores

    table_p = jnp.zeros((V_pad, E_pad), compute_dtype).at[:V, :E].set(
        embedding_table.astype(compute_dtype))
    w_fc_p = jnp.zeros((E_pad, H_pad), compute_dtype).at[:E, :H].set(
        w_fc.T.astype(compute_dtype))
    b_fc_p = jnp.zeros((1, H_pad), jnp.float32).at[0, :H].set(
        b_fc.astype(jnp.float32))
    w_out_p = jnp.zeros((H_pad, O_pad), compute_dtype).at[:H, :O].set(
        w_out.T.astype(compute_dtype))
    b_out_p = jnp.zeros((1, O_pad), jnp.float32).at[0, :O].set(
        b_out.astype(jnp.float32))

    return (table_p, w_fc_p, b_fc_p, w_out_p, b_out_p), O


@functools.partial(jax.jit, static_argnames=("out_dim", "tb"))
def dnn_forward(token_ids, table_p, w_fc_p, b_fc_p, w_out_p, b_out_p,
                *, out_dim, tb=512):
    """token_ids: (B, S) int32; padded params from prepare_params.
    Returns (B, out_dim) float32."""
    B, S = token_ids.shape
    V_pad, E_pad = table_p.shape
    H_pad = w_fc_p.shape[1]
    O_pad = w_out_p.shape[1]

    # Batch tile: multiple of 8 sublanes; cap at ~half the batch so the
    # "parallel" grid has >= 2 steps (both v7x TensorCores get work).
    half_b = _round_up(max(_cdiv(B, 2), SUBLANE), SUBLANE)
    tb = max(SUBLANE, min(_round_up(tb, SUBLANE), half_b))
    B_pad = _round_up(B, tb)
    grid = (B_pad // tb,)

    ids_p = token_ids.astype(jnp.int32)
    if B_pad != B:
        ids_p = jnp.zeros((B_pad, S), jnp.int32).at[:B, :].set(ids_p)

    # Scoped-VMEM budget: single-buffered resident params + double-buffered
    # ids/out tiles + in-kernel intermediates, with 2x headroom.
    # (v5e default scoped VMEM is 16 MiB; v7x physical VMEM is 64 MiB/TC.)
    param_bytes = sum(int(p.size) * p.dtype.itemsize
                      for p in (table_p, w_fc_p, b_fc_p, w_out_p, b_out_p))
    tile_bytes = 2 * (tb * S * 4 + tb * O_pad * 4)
    scratch_bytes = tb * V_pad * 8 + 3 * tb * max(E_pad, H_pad, O_pad) * 4
    vmem_limit = int(min(max(2 * (param_bytes + tile_bytes + scratch_bytes),
                             8 << 20), 64 << 20))

    const_map = lambda i: (0, 0)
    out = pl.pallas_call(
        dnn_kernel,
        out_shape=jax.ShapeDtypeStruct((B_pad, O_pad), jnp.float32),
        grid=grid,
        in_specs=[
            # token ids: tiled over batch, default double-buffering.
            pl.BlockSpec((tb, S), lambda i: (i, 0)),
            # Constant-index operands: resident, single-buffered (halves their
            # VMEM footprint; their block index never changes).
            pl.BlockSpec((V_pad, E_pad), const_map, pipeline_mode=pl.Buffered(1)),
            pl.BlockSpec((E_pad, H_pad), const_map, pipeline_mode=pl.Buffered(1)),
            pl.BlockSpec((1, H_pad), const_map, pipeline_mode=pl.Buffered(1)),
            pl.BlockSpec((H_pad, O_pad), const_map, pipeline_mode=pl.Buffered(1)),
            pl.BlockSpec((1, O_pad), const_map, pipeline_mode=pl.Buffered(1)),
        ],
        out_specs=pl.BlockSpec((tb, O_pad), lambda i: (i, 0)),
        compiler_params=pltpu.CompilerParams(
            dimension_semantics=("parallel",),
            vmem_limit_bytes=vmem_limit),
    )(ids_p, table_p, w_fc_p, b_fc_p, w_out_p, b_out_p)

    return out[:B, :out_dim]


def reference_forward(token_ids, embedding_table, w_fc, b_fc, w_out, b_out):
    """Pure-JAX f32 reference matching the PyTorch forward."""
    x = jnp.take(embedding_table, token_ids, axis=0)   # embedding
    x = jax.nn.sigmoid(jnp.sum(x, axis=1))             # sigmoid(sum over seq)
    x = jax.nn.sigmoid(x @ w_fc.T + b_fc)              # sigmoid(fc(x))
    return x @ w_out.T + b_out                         # out(x)


if __name__ == "__main__":
    # Small shapes consistent with the module.
    vocab_size = 64
    embedding_dim = 32
    hidden_dim = 32
    output_dim = 8
    seq_len = 8
    batch = 16

    key = jax.random.PRNGKey(0)
    k_emb, k_wfc, k_bfc, k_wout, k_bout, k_tok = jax.random.split(key, 6)

    # Deterministic parameter init (synthetic; not a checkpoint).
    embedding_table = jax.random.normal(
        k_emb, (vocab_size, embedding_dim), jnp.float32) * 0.1
    w_fc = jax.random.normal(k_wfc, (hidden_dim, embedding_dim), jnp.float32) * 0.1
    b_fc = jax.random.normal(k_bfc, (hidden_dim,), jnp.float32) * 0.1
    w_out = jax.random.normal(k_wout, (output_dim, hidden_dim), jnp.float32) * 0.1
    b_out = jax.random.normal(k_bout, (output_dim,), jnp.float32) * 0.1

    token_ids = jax.random.randint(k_tok, (batch, seq_len), 0, vocab_size,
                                   dtype=jnp.int32)

    # One-time parameter padding/cast (hoisted out of the per-call path).
    (table_p, w_fc_p, b_fc_p, w_out_p, b_out_p), out_dim = prepare_params(
        embedding_table, w_fc, b_fc, w_out, b_out)
    (table_p, w_fc_p, b_fc_p, w_out_p, b_out_p) = jax.block_until_ready(
        (table_p, w_fc_p, b_fc_p, w_out_p, b_out_p))

    out = dnn_forward(token_ids, table_p, w_fc_p, b_fc_p, w_out_p, b_out_p,
                      out_dim=out_dim)
    out = jax.block_until_ready(out)

    ref = reference_forward(token_ids, embedding_table, w_fc, b_fc, w_out, b_out)
    assert out.shape == (batch, output_dim)
    # bf16 matmul inputs -> loosened tolerance vs the f32 reference.
    assert jnp.allclose(out, ref, atol=2e-2, rtol=2e-2), "mismatch vs reference"

    print("KERNEL_OK")
</pallas_src>

<mosaic_0001>
module attributes {stable_mosaic.version = 11 : i64} {
  func.func @dnn_kernel(%arg0: i32, %arg1: memref<8x8xi32, #tpu.memory_space<vmem>>, %arg2: memref<128x128xbf16, #tpu.memory_space<vmem>>, %arg3: memref<128x128xbf16, #tpu.memory_space<vmem>>, %arg4: memref<1x128xf32, #tpu.memory_space<vmem>>, %arg5: memref<128x128xbf16, #tpu.memory_space<vmem>>, %arg6: memref<1x128xf32, #tpu.memory_space<vmem>>, %arg7: memref<8x128xf32, #tpu.memory_space<vmem>>) attributes {dimension_semantics = [#tpu.dimension_semantics<parallel>], iteration_bounds = array<i64: 2>, scalar_prefetch = 0 : i64, scratch_operands = 0 : i64, tpu.core_type = #tpu.core_type<tc>, window_params = [{transform_indices = @transform_0, window_bounds = array<i64: 8, 8>}, {pipeline_mode = #tpu.pipeline_mode<synchronous>, transform_indices = @transform_1, window_bounds = array<i64: 128, 128>}, {pipeline_mode = #tpu.pipeline_mode<synchronous>, transform_indices = @transform_2, window_bounds = array<i64: 128, 128>}, {pipeline_mode = #tpu.pipeline_mode<synchronous>, transform_indices = @transform_3, window_bounds = array<i64: 1, 128>}, {pipeline_mode = #tpu.pipeline_mode<synchronous>, transform_indices = @transform_4, window_bounds = array<i64: 128, 128>}, {pipeline_mode = #tpu.pipeline_mode<synchronous>, transform_indices = @transform_5, window_bounds = array<i64: 1, 128>}, {transform_indices = @transform_6, window_bounds = array<i64: 8, 128>}]} {
    %c0 = arith.constant 0 : index
    %c0_0 = arith.constant 0 : index
    %0 = vector.load %arg1[%c0, %c0_0] : memref<8x8xi32, #tpu.memory_space<vmem>>, vector<8x8xi32>
    %1 = tpu.iota {dimensions = array<i32: 1>} : vector<1x128xi32>
    %c0_i32 = arith.constant 0 : i32
    %2 = vector.broadcast %c0_i32 : i32 to vector<8x128xi32>
    %3 = vector.extract_strided_slice %0 {offsets = [0, 0], sizes = [8, 1], strides = [1, 1]} : vector<8x8xi32> to vector<8x1xi32>
    %4 = vector.broadcast %3 : vector<8x1xi32> to vector<8x128xi32>
    %5 = vector.broadcast %1 : vector<1x128xi32> to vector<8x128xi32>
    %6 = arith.cmpi eq, %4, %5 : vector<8x128xi32>
    %7 = arith.extui %6 : vector<8x128xi1> to vector<8x128xi32>
    %8 = arith.addi %2, %7 : vector<8x128xi32>
    %9 = vector.extract_strided_slice %0 {offsets = [0, 1], sizes = [8, 1], strides = [1, 1]} : vector<8x8xi32> to vector<8x1xi32>
    %10 = vector.broadcast %9 : vector<8x1xi32> to vector<8x128xi32>
    %11 = vector.broadcast %1 : vector<1x128xi32> to vector<8x128xi32>
    %12 = arith.cmpi eq, %10, %11 : vector<8x128xi32>
    %13 = arith.extui %12 : vector<8x128xi1> to vector<8x128xi32>
    %14 = arith.addi %8, %13 : vector<8x128xi32>
    %15 = vector.extract_strided_slice %0 {offsets = [0, 2], sizes = [8, 1], strides = [1, 1]} : vector<8x8xi32> to vector<8x1xi32>
    %16 = vector.broadcast %15 : vector<8x1xi32> to vector<8x128xi32>
    %17 = vector.broadcast %1 : vector<1x128xi32> to vector<8x128xi32>
    %18 = arith.cmpi eq, %16, %17 : vector<8x128xi32>
    %19 = arith.extui %18 : vector<8x128xi1> to vector<8x128xi32>
    %20 = arith.addi %14, %19 : vector<8x128xi32>
    %21 = vector.extract_strided_slice %0 {offsets = [0, 3], sizes = [8, 1], strides = [1, 1]} : vector<8x8xi32> to vector<8x1xi32>
    %22 = vector.broadcast %21 : vector<8x1xi32> to vector<8x128xi32>
    %23 = vector.broadcast %1 : vector<1x128xi32> to vector<8x128xi32>
    %24 = arith.cmpi eq, %22, %23 : vector<8x128xi32>
    %25 = arith.extui %24 : vector<8x128xi1> to vector<8x128xi32>
    %26 = arith.addi %20, %25 : vector<8x128xi32>
    %27 = vector.extract_strided_slice %0 {offsets = [0, 4], sizes = [8, 1], strides = [1, 1]} : vector<8x8xi32> to vector<8x1xi32>
    %28 = vector.broadcast %27 : vector<8x1xi32> to vector<8x128xi32>
    %29 = vector.broadcast %1 : vector<1x128xi32> to vector<8x128xi32>
    %30 = arith.cmpi eq, %28, %29 : vector<8x128xi32>
    %31 = arith.extui %30 : vector<8x128xi1> to vector<8x128xi32>
    %32 = arith.addi %26, %31 : vector<8x128xi32>
    %33 = vector.extract_strided_slice %0 {offsets = [0, 5], sizes = [8, 1], strides = [1, 1]} : vector<8x8xi32> to vector<8x1xi32>
    %34 = vector.broadcast %33 : vector<8x1xi32> to vector<8x128xi32>
    %35 = vector.broadcast %1 : vector<1x128xi32> to vector<8x128xi32>
    %36 = arith.cmpi eq, %34, %35 : vector<8x128xi32>
    %37 = arith.extui %36 : vector<8x128xi1> to vector<8x128xi32>
    %38 = arith.addi %32, %37 : vector<8x128xi32>
    %39 = vector.extract_strided_slice %0 {offsets = [0, 6], sizes = [8, 1], strides = [1, 1]} : vector<8x8xi32> to vector<8x1xi32>
    %40 = vector.broadcast %39 : vector<8x1xi32> to vector<8x128xi32>
    %41 = vector.broadcast %1 : vector<1x128xi32> to vector<8x128xi32>
    %42 = arith.cmpi eq, %40, %41 : vector<8x128xi32>
    %43 = arith.extui %42 : vector<8x128xi1> to vector<8x128xi32>
    %44 = arith.addi %38, %43 : vector<8x128xi32>
    %45 = vector.extract_strided_slice %0 {offsets = [0, 7], sizes = [8, 1], strides = [1, 1]} : vector<8x8xi32> to vector<8x1xi32>
    %46 = vector.broadcast %45 : vector<8x1xi32> to vector<8x128xi32>
    %47 = vector.broadcast %1 : vector<1x128xi32> to vector<8x128xi32>
    %48 = arith.cmpi eq, %46, %47 : vector<8x128xi32>
    %49 = arith.extui %48 : vector<8x128xi1> to vector<8x128xi32>
    %50 = arith.addi %44, %49 : vector<8x128xi32>
    %51 = arith.sitofp %50 : vector<8x128xi32> to vector<8x128xbf16>
    %c0_1 = arith.constant 0 : index
    %c0_2 = arith.constant 0 : index
    %52 = vector.load %arg2[%c0_1, %c0_2] : memref<128x128xbf16, #tpu.memory_space<vmem>>, vector<128x128xbf16>
    %cst = arith.constant dense<0.000000e+00> : vector<8x128xf32>
    %53 = tpu.matmul %51, %52, %cst {dimension_numbers = #tpu.dot_dimension_numbers<[1], [0], [0], [1], [0, 0, 1, 1], [], []>} : vector<8x128xbf16>, vector<128x128xbf16>, vector<8x128xf32> -> vector<8x128xf32>
    %54 = arith.negf %53 : vector<8x128xf32>
    %55 = math.exp %54 : vector<8x128xf32>
    %cst_3 = arith.constant 1.000000e+00 : f32
    %56 = vector.broadcast %cst_3 : f32 to vector<8x128xf32>
    %57 = arith.addf %56, %55 : vector<8x128xf32>
    %58 = arith.divf %56, %57 : vector<8x128xf32>
    %59 = arith.truncf %58 : vector<8x128xf32> to vector<8x128xbf16>
    %c0_4 = arith.constant 0 : index
    %c0_5 = arith.constant 0 : index
    %60 = vector.load %arg3[%c0_4, %c0_5] : memref<128x128xbf16, #tpu.memory_space<vmem>>, vector<128x128xbf16>
    %cst_6 = arith.constant dense<0.000000e+00> : vector<8x128xf32>
    %61 = tpu.matmul %59, %60, %cst_6 {dimension_numbers = #tpu.dot_dimension_numbers<[1], [0], [0], [1], [0, 0, 1, 1], [], []>} : vector<8x128xbf16>, vector<128x128xbf16>, vector<8x128xf32> -> vector<8x128xf32>
    %c0_7 = arith.constant 0 : index
    %c0_8 = arith.constant 0 : index
    %62 = vector.load %arg4[%c0_7, %c0_8] : memref<1x128xf32, #tpu.memory_space<vmem>>, vector<1x128xf32>
    %63 = vector.broadcast %62 : vector<1x128xf32> to vector<8x128xf32>
    %64 = arith.addf %61, %63 : vector<8x128xf32>
    %65 = arith.negf %64 : vector<8x128xf32>
    %66 = math.exp %65 : vector<8x128xf32>
    %cst_9 = arith.constant 1.000000e+00 : f32
    %67 = vector.broadcast %cst_9 : f32 to vector<8x128xf32>
    %68 = arith.addf %67, %66 : vector<8x128xf32>
    %69 = arith.divf %67, %68 : vector<8x128xf32>
    %70 = arith.truncf %69 : vector<8x128xf32> to vector<8x128xbf16>
    %c0_10 = arith.constant 0 : index
    %c0_11 = arith.constant 0 : index
    %71 = vector.load %arg5[%c0_10, %c0_11] : memref<128x128xbf16, #tpu.memory_space<vmem>>, vector<128x128xbf16>
    %cst_12 = arith.constant dense<0.000000e+00> : vector<8x128xf32>
    %72 = tpu.matmul %70, %71, %cst_12 {dimension_numbers = #tpu.dot_dimension_numbers<[1], [0], [0], [1], [0, 0, 1, 1], [], []>} : vector<8x128xbf16>, vector<128x128xbf16>, vector<8x128xf32> -> vector<8x128xf32>
    %c0_13 = arith.constant 0 : index
    %c0_14 = arith.constant 0 : index
    %73 = vector.load %arg6[%c0_13, %c0_14] : memref<1x128xf32, #tpu.memory_space<vmem>>, vector<1x128xf32>
    %74 = vector.broadcast %73 : vector<1x128xf32> to vector<8x128xf32>
    %75 = arith.addf %72, %74 : vector<8x128xf32>
    %c0_15 = arith.constant 0 : index
    %c0_16 = arith.constant 0 : index
    %76 = vector.load %arg7[%c0_15, %c0_16] : memref<8x128xf32, #tpu.memory_space<vmem>>, vector<8x128xf32>
    tpu.vector_store %arg7[%c0_15, %c0_16], %75 {strides = array<i32>} : memref<8x128xf32, #tpu.memory_space<vmem>>, vector<8x128xf32>,
    return
  }
  func.func @transform_0(%arg0: i32) -> (i32, i32) {
    %c0_i32 = arith.constant 0 : i32
    %c0_i32_0 = arith.constant 0 : i32
    return %arg0, %c0_i32 : i32, i32
  }
  func.func @transform_1(%arg0: i32) -> (i32, i32) {
    %c0_i32 = arith.constant 0 : i32
    %c0_i32_0 = arith.constant 0 : i32
    %c0_i32_1 = arith.constant 0 : i32
    return %c0_i32, %c0_i32_0 : i32, i32
  }
  func.func @transform_2(%arg0: i32) -> (i32, i32) {
    %c0_i32 = arith.constant 0 : i32
    %c0_i32_0 = arith.constant 0 : i32
    %c0_i32_1 = arith.constant 0 : i32
    return %c0_i32, %c0_i32_0 : i32, i32
  }
  func.func @transform_3(%arg0: i32) -> (i32, i32) {
    %c0_i32 = arith.constant 0 : i32
    %c0_i32_0 = arith.constant 0 : i32
    %c0_i32_1 = arith.constant 0 : i32
    return %c0_i32, %c0_i32_0 : i32, i32
  }
  func.func @transform_4(%arg0: i32) -> (i32, i32) {
    %c0_i32 = arith.constant 0 : i32
    %c0_i32_0 = arith.constant 0 : i32
    %c0_i32_1 = arith.constant 0 : i32
    return %c0_i32, %c0_i32_0 : i32, i32
  }
  func.func @transform_5(%arg0: i32) -> (i32, i32) {
    %c0_i32 = arith.constant 0 : i32
    %c0_i32_0 = arith.constant 0 : i32
    %c0_i32_1 = arith.constant 0 : i32
    return %c0_i32, %c0_i32_0 : i32, i32
  }
  func.func @transform_6(%arg0: i32) -> (i32, i32) {
    %c0_i32 = arith.constant 0 : i32
    %c0_i32_0 = arith.constant 0 : i32
    return %arg0, %c0_i32 : i32, i32
  }
}

</mosaic_0001>

<llo_original>
// kernel: dnn_forward.1
$region0: #{dnn_forward.1}
  #allocation0 [shape = 'u32[]', space=smem, size = 0x4, offset = 0x4, fixed_abs, tag = 'smem constant byte address 0x4 - core index']
  #allocation1 [shape = 'u32[144,128]{1,0:T(1,128)}', space=vmem, size = 0x12000, scoped, tag = 'internal scratch']
  %s0 = inlined_call_operand.vmem [shape: s32[16,8], index: 0, kind: input, shape index: {}]
  %s1 = inlined_call_operand.hbm [shape: bf16[128,128], index: 1, kind: input, shape index: {}]
  %s2 = inlined_call_operand.hbm [shape: bf16[128,128], index: 2, kind: input, shape index: {}]
  %s3 = inlined_call_operand.vmem [shape: f32[1,128], index: 3, kind: input, shape index: {}]
  %s4 = inlined_call_operand.hbm [shape: bf16[128,128], index: 4, kind: input, shape index: {}]
  %s5 = inlined_call_operand.vmem [shape: f32[1,128], index: 5, kind: input, shape index: {}]
  %s6 = inlined_call_operand.vmem [shape: f32[16,128], index: 6, kind: output, shape index: {}]
  %s7 = sld [smem:[#allocation0]]
  $region69: #{dnn_forward.1} parent=0
    _
  %s9 = ssub.s32 1, %s7
  %s10 = scalar_select 0, %s9, %s7
  $region1: #{dnn_forward.1} parent=0
    #allocation2 [shape = 'u8[32768]{0}', space=vmem, size = 0x8000, scoped, tag = 'input window, operand 1, single buffered']
    #allocation3 [shape = 's32[2]{0}', space=sflag, size = 0x8, scoped, tag = 'scoped memory for dnn_forward.1']
    #allocation4 [shape = 'u8[32768]{0}', space=vmem, size = 0x8000, scoped, tag = 'input window, operand 2, single buffered']
    #allocation5 [shape = 's32[1]{0}', space=sflag, size = 0x4, scoped, tag = 'scoped memory for dnn_forward.1']
    #allocation6 [shape = 'u8[32768]{0}', space=vmem, size = 0x8000, scoped, tag = 'input window, operand 4, single buffered']
    %11 = vsyncpa [#allocation3], 0
    %12 = vsyncpa [#allocation5], 0
    loop: start=0, step=1, limit=4
    $region2: #{dnn_forward.1} parent=1 // loop_pre_header
      _
    $region3: #{dnn_forward.1} parent=1 // loop_header
      %s14 = sphi 0, %s18
      %p15 = scmp.ge.s32.totalorder %s14, 4
      %s24 = sphi 0, %s26
      %s27 = sphi 0, %s24
      %s28 = sphi 0, %s27
      %s44 = sphi 0, %s28
      %s48 = sphi 0, %s48
      %s50 = sphi 0, %s48
      %s51 = sphi 0, %s50
      %s65 = sphi 0, %s51
      %s69 = sphi 0, %s69
      %s71 = sphi 0, %s69
      %s72 = sphi 0, %s71
      %s86 = sphi 0, %s72
      %s90 = sphi 0, %s90
      %s92 = sphi 0, %s90
      %s93 = sphi 0, %s92
      %s107 = sphi 0, %s93
      %s111 = sphi 0, %s111
      %s113 = sphi 0, %s111
      %s114 = sphi 0, %s113
      %s128 = sphi 0, %s114
      %s132 = sphi 0, %s132
      %s134 = sphi 0, %s132
      %s135 = sphi 0, %s134
      %s149 = sphi 0, %s135
      %s155 = sphi 0, %s157
      %s158 = sphi 0, %s155
      %s159 = sphi 0, %s158
      %s175 = sphi 0, %s159
    $region4: #{dnn_forward.1} parent=1 // loop_header_branch
      %17 = sbr.rel (%p15) target = $region8
    $region5: #{dnn_forward.1} parent=1 // loop_body
      %s19 = ssub.s32 %s14, 1
      %s20 = ssub.s32 %s14, 2
      %s21 = sadd.s32 %s14, 1
      %s22 = ssub.s32 %s14, %s21
      %p23 = scmp.eq.s32.totalorder %s22, 0
      %s25 = sadd.s32 %s24, 1
      %s26 = scalar_select %p23, %s24, %s25
      %p29 = pneg %p23
      %p30 = scmp.eq.s32.totalorder %s14, 1
      %p31 = por %p29, %p30
      %p32 = scmp.ne.s32.totalorder %s24, %s27
      %p33 = scmp.eq.s32.totalorder %s14, 0
      %p34 = por %p32, %p33
      %p35 = scmp.ne.s32.totalorder %s24, %s27
      %p36 = scmp.eq.s32.totalorder %s19, 1
      %p37 = por %p35, %p36
      %p38 = scmp.ne.s32.totalorder %s27, %s28
      %p39 = scmp.eq.s32.totalorder %s19, 0
      %p40 = por %p38, %p39
      %p41 = scmp.ne.s32.totalorder %s27, %s28
      %p42 = scmp.eq.s32.totalorder %s20, 1
      %p43 = por %p41, %p42
      %p45 = scmp.ne.s32.totalorder %s28, %s44
      %p46 = scmp.eq.s32.totalorder %s20, 0
      %p47 = por %p45, %p46
      %s49 = sadd.s32 %s48, 1
      %p52 = scmp.eq.s32.totalorder %s14, 1
      %p53 = scmp.ne.s32.totalorder %s48, %s50
      %p54 = scmp.eq.s32.totalorder %s14, 0
      %p55 = por %p53, %p54
      %p56 = scmp.ne.s32.totalorder %s48, %s50
      %p57 = scmp.eq.s32.totalorder %s19, 1
      %p58 = por %p56, %p57
      %p59 = scmp.ne.s32.totalorder %s50, %s51
      %p60 = scmp.eq.s32.totalorder %s19, 0
      %p61 = por %p59, %p60
      %p62 = scmp.ne.s32.totalorder %s50, %s51
      %p63 = scmp.eq.s32.totalorder %s20, 1
      %p64 = por %p62, %p63
      %p66 = scmp.ne.s32.totalorder %s51, %s65
      %p67 = scmp.eq.s32.totalorder %s20, 0
      %p68 = por %p66, %p67
      %s70 = sadd.s32 %s69, 1
      %p73 = scmp.eq.s32.totalorder %s14, 1
      %p74 = scmp.ne.s32.totalorder %s69, %s71
      %p75 = scmp.eq.s32.totalorder %s14, 0
      %p76 = por %p74, %p75
      %p77 = scmp.ne.s32.totalorder %s69, %s71
      %p78 = scmp.eq.s32.totalorder %s19, 1
      %p79 = por %p77, %p78
      %p80 = scmp.ne.s32.totalorder %s71, %s72
      %p81 = scmp.eq.s32.totalorder %s19, 0
      %p82 = por %p80, %p81
      %p83 = scmp.ne.s32.totalorder %s71, %s72
      %p84 = scmp.eq.s32.totalorder %s20, 1
      %p85 = por %p83, %p84
      %p87 = scmp.ne.s32.totalorder %s72, %s86
      %p88 = scmp.eq.s32.totalorder %s20, 0
      %p89 = por %p87, %p88
      %s91 = sadd.s32 %s90, 1
      %p94 = scmp.eq.s32.totalorder %s14, 1
      %p95 = scmp.ne.s32.totalorder %s90, %s92
      %p96 = scmp.eq.s32.totalorder %s14, 0
      %p97 = por %p95, %p96
      %p98 = scmp.ne.s32.totalorder %s90, %s92
      %p99 = scmp.eq.s32.totalorder %s19, 1
      %p100 = por %p98, %p99
      %p101 = scmp.ne.s32.totalorder %s92, %s93
      %p102 = scmp.eq.s32.totalorder %s19, 0
      %p103 = por %p101, %p102
      %p104 = scmp.ne.s32.totalorder %s92, %s93
      %p105 = scmp.eq.s32.totalorder %s20, 1
      %p106 = por %p104, %p105
      %p108 = scmp.ne.s32.totalorder %s93, %s107
      %p109 = scmp.eq.s32.totalorder %s20, 0
      %p110 = por %p108, %p109
      %s112 = sadd.s32 %s111, 1
      %p115 = scmp.eq.s32.totalorder %s14, 1
      %p116 = scmp.ne.s32.totalorder %s111, %s113
      %p117 = scmp.eq.s32.totalorder %s14, 0
      %p118 = por %p116, %p117
      %p119 = scmp.ne.s32.totalorder %s111, %s113
      %p120 = scmp.eq.s32.totalorder %s19, 1
      %p121 = por %p119, %p120
      %p122 = scmp.ne.s32.totalorder %s113, %s114
      %p123 = scmp.eq.s32.totalorder %s19, 0
      %p124 = por %p122, %p123
      %p125 = scmp.ne.s32.totalorder %s113, %s114
      %p126 = scmp.eq.s32.totalorder %s20, 1
      %p127 = por %p125, %p126
      %p129 = scmp.ne.s32.totalorder %s114, %s128
      %p130 = scmp.eq.s32.totalorder %s20, 0
      %p131 = por %p129, %p130
      %s133 = sadd.s32 %s132, 1
      %p136 = scmp.eq.s32.totalorder %s14, 1
      %p137 = scmp.ne.s32.totalorder %s132, %s134
      %p138 = scmp.eq.s32.totalorder %s14, 0
      %p139 = por %p137, %p138
      %p140 = scmp.ne.s32.totalorder %s132, %s134
      %p141 = scmp.eq.s32.totalorder %s19, 1
      %p142 = por %p140, %p141
      %p143 = scmp.ne.s32.totalorder %s134, %s135
      %p144 = scmp.eq.s32.totalorder %s19, 0
      %p145 = por %p143, %p144
      %p146 = scmp.ne.s32.totalorder %s134, %s135
      %p147 = scmp.eq.s32.totalorder %s20, 1
      %p148 = por %p146, %p147
      %p150 = scmp.ne.s32.totalorder %s135, %s149
      %p151 = scmp.eq.s32.totalorder %s20, 0
      %p152 = por %p150, %p151
      %s153 = ssub.s32 %s14, %s21
      %p154 = scmp.eq.s32.totalorder %s153, 0
      %s156 = sadd.s32 %s155, 1
      %s157 = scalar_select %p154, %s155, %s156
      %p160 = pneg %p154
      %p161 = scmp.eq.s32.totalorder %s14, 1
      %p162 = por %p160, %p161
      %p163 = scmp.ne.s32.totalorder %s155, %s158
      %p164 = scmp.eq.s32.totalorder %s14, 0
      %p165 = por %p163, %p164
      %p166 = scmp.ne.s32.totalorder %s155, %s158
      %p167 = scmp.eq.s32.totalorder %s19, 1
      %p168 = por %p166, %p167
      %p169 = scmp.ne.s32.totalorder %s158, %s159
      %p170 = scmp.eq.s32.totalorder %s19, 0
      %p171 = por %p169, %p170
      %p172 = scmp.ne.s32.totalorder %s158, %s159
      %p173 = scmp.eq.s32.totalorder %s20, 1
      %p174 = por %p172, %p173
      %p176 = scmp.ne.s32.totalorder %s159, %s175
      %p177 = scmp.eq.s32.totalorder %s20, 0
      %p178 = por %p176, %p177
      %p179 = scmp.le.s32.totalorder 1, %s14
      %p180 = scmp.lt.s32.totalorder %s14, 3
      %p181 = pnand %p179, %p180
      %p182 = pneg %p181
      // Predicated region
      $region9: #{dnn_forward.1} parent=5 // pred_check
        _
      $region10: #{dnn_forward.1} parent=5 // pred_check_branch
        %184 = sbr.rel (%p181) target = $region12
      $region11: #{dnn_forward.1} parent=5 // pred_region
        %s185 = ssub.s32 %s14, 1
        // Predicated region
        $region13: #{dnn_forward.1} parent=11 // pred_check
          %p186 = pneg %p61
        $region14: #{dnn_forward.1} parent=11 // pred_check_branch
          %188 = sbr.rel (%p186) target = $region16
        $region15: #{dnn_forward.1} parent=11 // pred_region
          %s190 = ssub.s32 1024, 1024
          %191 = vsyncadd [#allocation3], %s190
          %s192 = sshll.u32 [#allocation2], 4
          %s193 = int_to_ptr.vmem [resolvable:$true] %s192
          %198 = dma.hbm_to_vmem [thread:$0]  %s1, 1024, %s193, [#allocation3], 64, 64, 4
        $region16: #{dnn_forward.1} parent=11 // pred_fallthru
          _
        // Predicated region
        $region17: #{dnn_forward.1} parent=11 // pred_check
          %p199 = pneg %p82
        $region18: #{dnn_forward.1} parent=11 // pred_check_branch
          %201 = sbr.rel (%p199) target = $region20
        $region19: #{dnn_forward.1} parent=11 // pred_region
          %s203 = ssub.s32 1024, 1024
          %204 = vsyncadd [#allocation5], %s203
          %s205 = sshll.u32 [#allocation4], 4
          %s206 = int_to_ptr.vmem [resolvable:$true] %s205
          %211 = dma.hbm_to_vmem [thread:$0]  %s2, 1024, %s206, [#allocation5], 64, 64, 4
        $region20: #{dnn_forward.1} parent=11 // pred_fallthru
          _
        // Predicated region
        $region21: #{dnn_forward.1} parent=11 // pred_check
          %p212 = pneg %p103
        $region22: #{dnn_forward.1} parent=11 // pred_check_branch
          %214 = sbr.rel (%p212) target = $region24
        $region23: #{dnn_forward.1} parent=11 // pred_region
          _
        $region24: #{dnn_forward.1} parent=11 // pred_fallthru
          _
        // Predicated region
        $region25: #{dnn_forward.1} parent=11 // pred_check
          %p215 = pneg %p124
        $region26: #{dnn_forward.1} parent=11 // pred_check_branch
          %217 = sbr.rel (%p215) target = $region28
        $region27: #{dnn_forward.1} parent=11 // pred_region
          %s219 = ssub.s32 1024, 1024
          %220 = vsyncadd [#allocation5], %s219
          %s221 = sshll.u32 [#allocation6], 4
          %s222 = int_to_ptr.vmem [resolvable:$true] %s221
          %227 = dma.hbm_to_vmem [thread:$0]  %s4, 1024, %s222, [#allocation5], 64, 64, 4
        $region28: #{dnn_forward.1} parent=11 // pred_fallthru
          _
        // Predicated region
        $region29: #{dnn_forward.1} parent=11 // pred_check
          %p228 = pneg %p145
        $region30: #{dnn_forward.1} parent=11 // pred_check_branch
          %230 = sbr.rel (%p228) target = $region32
        $region31: #{dnn_forward.1} parent=11 // pred_region
          _
        $region32: #{dnn_forward.1} parent=11 // pred_fallthru
          _
      $region12: #{dnn_forward.1} parent=5 // pred_fallthru
        _
      %p231 = scmp.lt.s32.totalorder %s14, 2
      // Predicated region
      $region33: #{dnn_forward.1} parent=5 // pred_check
        %p232 = pneg %p231
      $region34: #{dnn_forward.1} parent=5 // pred_check_branch
        %234 = sbr.rel (%p232) target = $region36
      $region35: #{dnn_forward.1} parent=5 // pred_region
        // Predicated region
        $region37: #{dnn_forward.1} parent=35 // pred_check
          %p235 = pneg %p34
        $region38: #{dnn_forward.1} parent=35 // pred_check_branch
          %237 = sbr.rel (%p235) target = $region40
        $region39: #{dnn_forward.1} parent=35 // pred_region
          %p238 = scmp.lt.s32.totalorder %s14, 1
          %s239 = scalar_select %p238, %s14, 1
          %s240 = smul.addr %s239, 8
          %s241 = scalar_lea.vmem %s0, %s240
        $region40: #{dnn_forward.1} parent=35 // pred_fallthru
          _
      $region36: #{dnn_forward.1} parent=5 // pred_fallthru
        _
      %p242 = scmp.le.s32.totalorder 1, %s14
      %p243 = scmp.lt.s32.totalorder %s14, 3
      %p244 = pnand %p242, %p243
      %p245 = pneg %p244
      // Predicated region
      $region41: #{dnn_forward.1} parent=5 // pred_check
        _
      $region42: #{dnn_forward.1} parent=5 // pred_check_branch
        %247 = sbr.rel (%p244) target = $region44
      $region43: #{dnn_forward.1} parent=5 // pred_region
        %s248 = ssub.s32 %s14, 1
        // Predicated region
        $region45: #{dnn_forward.1} parent=43 // pred_check
          %p249 = pneg %p61
        $region46: #{dnn_forward.1} parent=43 // pred_check_branch
          %251 = sbr.rel (%p249) target = $region48
        $region47: #{dnn_forward.1} parent=43 // pred_region
          %252 = dma.done [#allocation3], 1024
        $region48: #{dnn_forward.1} parent=43 // pred_fallthru
          _
        // Predicated region
        $region49: #{dnn_forward.1} parent=43 // pred_check
          %p253 = pneg %p82
        $region50: #{dnn_forward.1} parent=43 // pred_check_branch
          %255 = sbr.rel (%p253) target = $region52
        $region51: #{dnn_forward.1} parent=43 // pred_region
          %256 = dma.done [#allocation5], 1024
        $region52: #{dnn_forward.1} parent=43 // pred_fallthru
          _
        // Predicated region
        $region53: #{dnn_forward.1} parent=43 // pred_check
          %p257 = pneg %p124
        $region54: #{dnn_forward.1} parent=43 // pred_check_branch
          %259 = sbr.rel (%p257) target = $region56
        $region55: #{dnn_forward.1} parent=43 // pred_region
          %260 = dma.done [#allocation5], 1024
        $region56: #{dnn_forward.1} parent=43 // pred_fallthru
          _
        %p261 = scmp.lt.s32.totalorder %s19, 1
        %s262 = scalar_select %p261, %s19, 1
        %s263 = smul.addr %s262, 8
        %s264 = scalar_lea.vmem %s0, %s263
        %p265 = pneg %p40
        %p266 = pneg %p37
        %p267 = pneg %p61
        %p268 = pneg %p58
        %p269 = pneg %p82
        %p270 = pneg %p79
        %p271 = pneg %p103
        %p272 = pneg %p100
        %p273 = pneg %p124
        %p274 = pneg %p121
        %p275 = pneg %p145
        %p276 = pneg %p142
        %p277 = pneg %p171
        %p278 = pneg %p168
        %p279 = scmp.lt.s32.totalorder %s19, 1
        %s280 = scalar_select %p279, %s19, 1
        %s281 = smul.addr %s280, 8
        %s282 = scalar_lea.vmem %s6, %s281
        %p283 = scmp.lt.s32.totalorder %s19, 1
        %s284 = scalar_select %p283, %s19, 1
        %s285 = smul.addr %s284, 8
        %s286 = scalar_lea.vmem %s0, %s285
        %p287 = scmp.lt.s32.totalorder %s19, 1
        %s288 = scalar_select %p287, %s19, 1
        %s289 = smul.addr %s288, 8
        %s290 = scalar_lea.vmem %s6, %s289
        %v292 = vld [vmem:[%s286] sm:$0xff]
        %v293 = vlaneseq
        %v294 = vand.u32 %v293, 127
        %295 = vset.pattern.permute.xlu0 0
        %296 = vperm.xlu0 %295, %v292
        %v297 = vpop.permute.xlu0 %296
        %vm298 = vcmp.eq.s32.totalorder %v297, %v294
        %v299 = vsel %vm298, 1, 0
        %300 = vset.pattern.permute.xlu0 1
        %301 = vperm.xlu0 %300, %v292
        %v302 = vpop.permute.xlu0 %301
        %vm303 = vcmp.eq.s32.totalorder %v302, %v294
        %v304 = vsel %vm303, 1, 0
        %v305 = vadd.s32 %v299, %v304
        %306 = vset.pattern.permute.xlu0 2
        %307 = vperm.xlu0 %306, %v292
        %v308 = vpop.permute.xlu0 %307
        %vm309 = vcmp.eq.s32.totalorder %v308, %v294
        %v310 = vsel %vm309, 1, 0
        %v311 = vadd.s32 %v305, %v310
        %312 = vset.pattern.permute.xlu0 3
        %313 = vperm.xlu0 %312, %v292
        %v314 = vpop.permute.xlu0 %313
        %vm315 = vcmp.eq.s32.totalorder %v314, %v294
        %v316 = vsel %vm315, 1, 0
        %v317 = vadd.s32 %v311, %v316
        %318 = vset.pattern.permute.xlu0 4
        %319 = vperm.xlu0 %318, %v292
        %v320 = vpop.permute.xlu0 %319
        %vm321 = vcmp.eq.s32.totalorder %v320, %v294
        %v322 = vsel %vm321, 1, 0
        %v323 = vadd.s32 %v317, %v322
        %324 = vset.pattern.permute.xlu0 5
        %325 = vperm.xlu0 %324, %v292
        %v326 = vpop.permute.xlu0 %325
        %vm327 = vcmp.eq.s32.totalorder %v326, %v294
        %v328 = vsel %vm327, 1, 0
        %v329 = vadd.s32 %v323, %v328
        %330 = vset.pattern.permute.xlu0 6
        %331 = vperm.xlu0 %330, %v292
        %v332 = vpop.permute.xlu0 %331
        %vm333 = vcmp.eq.s32.totalorder %v332, %v294
        %v334 = vsel %vm333, 1, 0
        %v335 = vadd.s32 %v329, %v334
        %336 = vset.pattern.permute.xlu0 7
        %337 = vperm.xlu0 %336, %v292
        %v338 = vpop.permute.xlu0 %337
        %vm339 = vcmp.eq.s32.totalorder %v338, %v294
        %v340 = vsel %vm339, 1, 0
        %v341 = vadd.s32 %v335, %v340
        %v342 = vcvt.s32.f32 %v341
        %v343 = vpack.c.bf16 %v342, %v342
        %v344 = vld [vmem:[#allocation2] sm:$0xf]
        %v345 = vld [vmem:[#allocation2 + $0x4] sm:$0xf]
        %v346 = vld [vmem:[#allocation2 + $0x8] sm:$0xf]
        %v347 = vld [vmem:[#allocation2 + $0xc] sm:$0xf]
        %v348 = vld [vmem:[#allocation2 + $0x10] sm:$0xf]
        %v349 = vld [vmem:[#allocation2 + $0x14] sm:$0xf]
        %v350 = vld [vmem:[#allocation2 + $0x18] sm:$0xf]
        %v351 = vld [vmem:[#allocation2 + $0x1c] sm:$0xf]
        %v352 = vld [vmem:[#allocation2 + $0x20] sm:$0xf]
        %v353 = vld [vmem:[#allocation2 + $0x24] sm:$0xf]
        %v354 = vld [vmem:[#allocation2 + $0x28] sm:$0xf]
        %v355 = vld [vmem:[#allocation2 + $0x2c] sm:$0xf]
        %v356 = vld [vmem:[#allocation2 + $0x30] sm:$0xf]
        %v357 = vld [vmem:[#allocation2 + $0x34] sm:$0xf]
        %v358 = vld [vmem:[#allocation2 + $0x38] sm:$0xf]
        %v359 = vld [vmem:[#allocation2 + $0x3c] sm:$0xf]
        %v376 = vunpack.c.l.b16 %v344
        %v377 = vunpack.c.l.b16 %v345
        %v378 = vunpack.c.l.b16 %v346
        %v379 = vunpack.c.l.b16 %v347
        %v380 = vunpack.c.l.b16 %v348
        %v381 = vunpack.c.l.b16 %v349
        %v382 = vunpack.c.l.b16 %v350
        %v383 = vunpack.c.l.b16 %v351
        %v384 = vunpack.c.l.b16 %v352
        %v385 = vunpack.c.l.b16 %v353
        %v386 = vunpack.c.l.b16 %v354
        %v387 = vunpack.c.l.b16 %v355
        %v388 = vunpack.c.l.b16 %v356
        %v389 = vunpack.c.l.b16 %v357
        %v390 = vunpack.c.l.b16 %v358
        %v391 = vunpack.c.l.b16 %v359
        %v392 = vpack.c.b16 %v377, %v376
        %v393 = vpack.c.b16 %v379, %v378
        %v394 = vpack.c.b16 %v381, %v380
        %v395 = vpack.c.b16 %v383, %v382
        %v396 = vpack.c.b16 %v385, %v384
        %v397 = vpack.c.b16 %v387, %v386
        %v398 = vpack.c.b16 %v389, %v388
        %v399 = vpack.c.b16 %v391, %v390
        %408 = vmatprep.subr.bf16.mxu0 0
        %409 = vmatpush1.bf16.msra.mxu0 %v399
        %410 = vmatprep.subr.bf16.mxu0 0
        %411 = vmatpush1.bf16.msra.mxu0 %v398
        %412 = vmatprep.subr.bf16.mxu0 0
        %413 = vmatpush1.bf16.msra.mxu0 %v397
        %414 = vmatprep.subr.bf16.mxu0 0
        %415 = vmatpush1.bf16.msra.mxu0 %v396
        %416 = vmatprep.subr.bf16.mxu0 0
        %417 = vmatpush1.bf16.msra.mxu0 %v395
        %418 = vmatprep.subr.bf16.mxu0 0
        %419 = vmatpush1.bf16.msra.mxu0 %v394
        %420 = vmatprep.subr.bf16.mxu0 0
        %421 = vmatpush1.bf16.msra.mxu0 %v393
        %422 = vmatprep.subr.bf16.mxu0 0
        %423 = vmatpush1.bf16.msra.mxu0 %v392
        %424 = vmatprep.subr.bf16.mxu0 0
        %425 = vmatpush2.bf16.msra.mxu0 0
        %426 = vmatprep.subr.bf16.mxu0 0
        %427 = vmatpush2.bf16.msra.mxu0 0
        %428 = vmatprep.subr.bf16.mxu0 0
        %429 = vmatpush2.bf16.msra.mxu0 0
        %430 = vmatprep.subr.bf16.mxu0 0
        %431 = vmatpush2.bf16.msra.mxu0 0
        %432 = vmatprep.subr.bf16.mxu0 0
        %433 = vmatpush2.bf16.msra.mxu0 0
        %434 = vmatprep.subr.bf16.mxu0 0
        %435 = vmatpush2.bf16.msra.mxu0 0
        %436 = vmatprep.subr.bf16.mxu0 0
        %437 = vmatpush2.bf16.msra.mxu0 0
        %438 = vmatprep.subr.bf16.mxu0 0
        %439 = vmatpush2.bf16.msra.mxu0 0
        %440 = vmatprep.mubr.bf16.mxu0 0
        %441 = vmatmul.mubr.bf16.gmra.mxu0 %v343
        %v442 = vpop.f32.mrf.mxu0
        %v443 = vadd.f32 0.0, %v442
        %v444 = vpop.f32.mrf.mxu0
        %v445 = vpop.f32.mrf.mxu0
        %v446 = vpop.f32.mrf.mxu0
        %447 = vdwg.mxu0
        %v448 = vxor.u32 %v443, 2147483648
        %v449 = vmul.f32 %v448, 1.442695
        %v450 = vpow.pop %v449
        %v451 = vadd.f32 %v450, 1.0
        %v452 = vrcp.pop %v451
        %v453 = vmul.f32 1.0, %v452
        %v454 = vpack.c.bf16 %v453, %v453
        %v455 = vld [vmem:[#allocation4] sm:$0xf]
        %v456 = vld [vmem:[#allocation4 + $0x4] sm:$0xf]
        %v457 = vld [vmem:[#allocation4 + $0x8] sm:$0xf]
        %v458 = vld [vmem:[#allocation4 + $0xc] sm:$0xf]
        %v459 = vld [vmem:[#allocation4 + $0x10] sm:$0xf]
        %v460 = vld [vmem:[#allocation4 + $0x14] sm:$0xf]
        %v461 = vld [vmem:[#allocation4 + $0x18] sm:$0xf]
        %v462 = vld [vmem:[#allocation4 + $0x1c] sm:$0xf]
        %v463 = vld [vmem:[#allocation4 + $0x20] sm:$0xf]
        %v464 = vld [vmem:[#allocation4 + $0x24] sm:$0xf]
        %v465 = vld [vmem:[#allocation4 + $0x28] sm:$0xf]
        %v466 = vld [vmem:[#allocation4 + $0x2c] sm:$0xf]
        %v467 = vld [vmem:[#allocation4 + $0x30] sm:$0xf]
        %v468 = vld [vmem:[#allocation4 + $0x34] sm:$0xf]
        %v469 = vld [vmem:[#allocation4 + $0x38] sm:$0xf]
        %v470 = vld [vmem:[#allocation4 + $0x3c] sm:$0xf]
        %v471 = vld [vmem:[%s3] sm:$0x1]
        %v473 = vlaneseq
        %v474 = vshrl.u32 %v473, 7
        %v475 = vsub.s32 0, %v474
        %v476 = vrot.slane %v471, %v475
        %v494 = vunpack.c.l.b16 %v455
        %v495 = vunpack.c.l.b16 %v456
        %v496 = vunpack.c.l.b16 %v457
        %v497 = vunpack.c.l.b16 %v458
        %v498 = vunpack.c.l.b16 %v459
        %v499 = vunpack.c.l.b16 %v460
        %v500 = vunpack.c.l.b16 %v461
        %v501 = vunpack.c.l.b16 %v462
        %v502 = vunpack.c.l.b16 %v463
        %v503 = vunpack.c.l.b16 %v464
        %v504 = vunpack.c.l.b16 %v465
        %v505 = vunpack.c.l.b16 %v466
        %v506 = vunpack.c.l.b16 %v467
        %v507 = vunpack.c.l.b16 %v468
        %v508 = vunpack.c.l.b16 %v469
        %v509 = vunpack.c.l.b16 %v470
        %v510 = vpack.c.b16 %v495, %v494
        %v511 = vpack.c.b16 %v497, %v496
        %v512 = vpack.c.b16 %v499, %v498
        %v513 = vpack.c.b16 %v501, %v500
        %v514 = vpack.c.b16 %v503, %v502
        %v515 = vpack.c.b16 %v505, %v504
        %v516 = vpack.c.b16 %v507, %v506
        %v517 = vpack.c.b16 %v509, %v508
        %526 = vmatprep.subr.bf16.mxu0 0
        %527 = vmatpush1.bf16.msra.mxu0 %v517
        %528 = vmatprep.subr.bf16.mxu0 0
        %529 = vmatpush1.bf16.msra.mxu0 %v516
        %530 = vmatprep.subr.bf16.mxu0 0
        %531 = vmatpush1.bf16.msra.mxu0 %v515
        %532 = vmatprep.subr.bf16.mxu0 0
        %533 = vmatpush1.bf16.msra.mxu0 %v514
        %534 = vmatprep.subr.bf16.mxu0 0
        %535 = vmatpush1.bf16.msra.mxu0 %v513
        %536 = vmatprep.subr.bf16.mxu0 0
        %537 = vmatpush1.bf16.msra.mxu0 %v512
        %538 = vmatprep.subr.bf16.mxu0 0
        %539 = vmatpush1.bf16.msra.mxu0 %v511
        %540 = vmatprep.subr.bf16.mxu0 0
        %541 = vmatpush1.bf16.msra.mxu0 %v510
        %542 = vmatprep.subr.bf16.mxu0 0
        %543 = vmatpush2.bf16.msra.mxu0 0
        %544 = vmatprep.subr.bf16.mxu0 0
        %545 = vmatpush2.bf16.msra.mxu0 0
        %546 = vmatprep.subr.bf16.mxu0 0
        %547 = vmatpush2.bf16.msra.mxu0 0
        %548 = vmatprep.subr.bf16.mxu0 0
        %549 = vmatpush2.bf16.msra.mxu0 0
        %550 = vmatprep.subr.bf16.mxu0 0
        %551 = vmatpush2.bf16.msra.mxu0 0
        %552 = vmatprep.subr.bf16.mxu0 0
        %553 = vmatpush2.bf16.msra.mxu0 0
        %554 = vmatprep.subr.bf16.mxu0 0
        %555 = vmatpush2.bf16.msra.mxu0 0
        %556 = vmatprep.subr.bf16.mxu0 0
        %557 = vmatpush2.bf16.msra.mxu0 0
        %558 = vmatprep.mubr.bf16.mxu0 0
        %559 = vmatmul.mubr.bf16.gmra.mxu0 %v454
        %v560 = vpop.f32.mrf.mxu0
        %v561 = vadd.f32 %v476, %v560
        %v562 = vpop.f32.mrf.mxu0
        %v563 = vpop.f32.mrf.mxu0
        %v564 = vpop.f32.mrf.mxu0
        %565 = vdwg.mxu0
        %v566 = vxor.u32 %v561, 2147483648
        %v567 = vmul.f32 %v566, 1.442695
        %v568 = vpow.pop %v567
        %v569 = vadd.f32 %v568, 1.0
        %v570 = vrcp.pop %v569
        %v571 = vmul.f32 1.0, %v570
        %v572 = vpack.c.bf16 %v571, %v571
        %v573 = vld [vmem:[#allocation6] sm:$0xf]
        %v574 = vld [vmem:[#allocation6 + $0x4] sm:$0xf]
        %v575 = vld [vmem:[#allocation6 + $0x8] sm:$0xf]
        %v576 = vld [vmem:[#allocation6 + $0xc] sm:$0xf]
        %v577 = vld [vmem:[#allocation6 + $0x10] sm:$0xf]
        %v578 = vld [vmem:[#allocation6 + $0x14] sm:$0xf]
        %v579 = vld [vmem:[#allocation6 + $0x18] sm:$0xf]
        %v580 = vld [vmem:[#allocation6 + $0x1c] sm:$0xf]
        %v581 = vld [vmem:[#allocation6 + $0x20] sm:$0xf]
        %v582 = vld [vmem:[#allocation6 + $0x24] sm:$0xf]
        %v583 = vld [vmem:[#allocation6 + $0x28] sm:$0xf]
        %v584 = vld [vmem:[#allocation6 + $0x2c] sm:$0xf]
        %v585 = vld [vmem:[#allocation6 + $0x30] sm:$0xf]
        %v586 = vld [vmem:[#allocation6 + $0x34] sm:$0xf]
        %v587 = vld [vmem:[#allocation6 + $0x38] sm:$0xf]
        %v588 = vld [vmem:[#allocation6 + $0x3c] sm:$0xf]
        %v589 = vld [vmem:[%s5] sm:$0x1]
        %v591 = vlaneseq
        %v592 = vshrl.u32 %v591, 7
        %v593 = vsub.s32 0, %v592
        %v594 = vrot.slane %v589, %v593
        %v612 = vunpack.c.l.b16 %v573
        %v613 = vunpack.c.l.b16 %v574
        %v614 = vunpack.c.l.b16 %v575
        %v615 = vunpack.c.l.b16 %v576
        %v616 = vunpack.c.l.b16 %v577
        %v617 = vunpack.c.l.b16 %v578
        %v618 = vunpack.c.l.b16 %v579
        %v619 = vunpack.c.l.b16 %v580
        %v620 = vunpack.c.l.b16 %v581
        %v621 = vunpack.c.l.b16 %v582
        %v622 = vunpack.c.l.b16 %v583
        %v623 = vunpack.c.l.b16 %v584
        %v624 = vunpack.c.l.b16 %v585
        %v625 = vunpack.c.l.b16 %v586
        %v626 = vunpack.c.l.b16 %v587
        %v627 = vunpack.c.l.b16 %v588
        %v628 = vpack.c.b16 %v613, %v612
        %v629 = vpack.c.b16 %v615, %v614
        %v630 = vpack.c.b16 %v617, %v616
        %v631 = vpack.c.b16 %v619, %v618
        %v632 = vpack.c.b16 %v621, %v620
        %v633 = vpack.c.b16 %v623, %v622
        %v634 = vpack.c.b16 %v625, %v624
        %v635 = vpack.c.b16 %v627, %v626
        %644 = vmatprep.subr.bf16.mxu0 0
        %645 = vmatpush1.bf16.msra.mxu0 %v635
        %646 = vmatprep.subr.bf16.mxu0 0
        %647 = vmatpush1.bf16.msra.mxu0 %v634
        %648 = vmatprep.subr.bf16.mxu0 0
        %649 = vmatpush1.bf16.msra.mxu0 %v633
        %650 = vmatprep.subr.bf16.mxu0 0
        %651 = vmatpush1.bf16.msra.mxu0 %v632
        %652 = vmatprep.subr.bf16.mxu0 0
        %653 = vmatpush1.bf16.msra.mxu0 %v631
        %654 = vmatprep.subr.bf16.mxu0 0
        %655 = vmatpush1.bf16.msra.mxu0 %v630
        %656 = vmatprep.subr.bf16.mxu0 0
        %657 = vmatpush1.bf16.msra.mxu0 %v629
        %658 = vmatprep.subr.bf16.mxu0 0
        %659 = vmatpush1.bf16.msra.mxu0 %v628
        %660 = vmatprep.subr.bf16.mxu0 0
        %661 = vmatpush2.bf16.msra.mxu0 0
        %662 = vmatprep.subr.bf16.mxu0 0
        %663 = vmatpush2.bf16.msra.mxu0 0
        %664 = vmatprep.subr.bf16.mxu0 0
        %665 = vmatpush2.bf16.msra.mxu0 0
        %666 = vmatprep.subr.bf16.mxu0 0
        %667 = vmatpush2.bf16.msra.mxu0 0
        %668 = vmatprep.subr.bf16.mxu0 0
        %669 = vmatpush2.bf16.msra.mxu0 0
        %670 = vmatprep.subr.bf16.mxu0 0
        %671 = vmatpush2.bf16.msra.mxu0 0
        %672 = vmatprep.subr.bf16.mxu0 0
        %673 = vmatpush2.bf16.msra.mxu0 0
        %674 = vmatprep.subr.bf16.mxu0 0
        %675 = vmatpush2.bf16.msra.mxu0 0
        %676 = vmatprep.mubr.bf16.mxu0 0
        %677 = vmatmul.mubr.bf16.gmra.mxu0 %v572
        %v678 = vpop.f32.mrf.mxu0
        %v679 = vadd.f32 %v594, %v678
        %v680 = vpop.f32.mrf.mxu0
        %v681 = vpop.f32.mrf.mxu0
        %v682 = vpop.f32.mrf.mxu0
        %683 = vdwg.mxu0
        %684 = vst [vmem:[%s290] sm:$0xff] %v679
        %p685 = scmp.lt.s32.totalorder %s19, 1
        %s686 = scalar_select %p685, %s19, 1
        %s687 = smul.addr %s686, 8
        %s688 = scalar_lea.vmem %s6, %s687
        // Predicated region
        $region57: #{dnn_forward.1} parent=43 // pred_check
          %p689 = pneg %p168
        $region58: #{dnn_forward.1} parent=43 // pred_check_branch
          %691 = sbr.rel (%p689) target = $region60
        $region59: #{dnn_forward.1} parent=43 // pred_region
          _
        $region60: #{dnn_forward.1} parent=43 // pred_fallthru
          _
      $region44: #{dnn_forward.1} parent=5 // pred_fallthru
        _
      %p692 = scmp.le.s32.totalorder 2, %s14
      // Predicated region
      $region61: #{dnn_forward.1} parent=5 // pred_check
        %p693 = pneg %p692
      $region62: #{dnn_forward.1} parent=5 // pred_check_branch
        %695 = sbr.rel (%p693) target = $region64
      $region63: #{dnn_forward.1} parent=5 // pred_region
        %s696 = ssub.s32 %s14, 2
        // Predicated region
        $region65: #{dnn_forward.1} parent=63 // pred_check
          %p697 = pneg %p174
        $region66: #{dnn_forward.1} parent=63 // pred_check_branch
          %699 = sbr.rel (%p697) target = $region68
        $region67: #{dnn_forward.1} parent=63 // pred_region
          %p700 = scmp.lt.s32.totalorder %s20, 1
          %s701 = scalar_select %p700, %s20, 1
          %s702 = smul.addr %s701, 8
          %s703 = scalar_lea.vmem %s6, %s702
        $region68: #{dnn_forward.1} parent=63 // pred_fallthru
          _
      $region64: #{dnn_forward.1} parent=5 // pred_fallthru
        _
    $region6: #{dnn_forward.1} parent=1 // loop_footer
      %s18 = sadd.s32 1, %s14
    $region7: #{dnn_forward.1} parent=1 // loop_footer_branch
      %13 = sbr.rel target = $region3
    $region8: #{dnn_forward.1} parent=1 // loop_exit
      _
    %704 = vsyncpa [#allocation3], 1
    %s705 = scalar_lea.sflag [#allocation3], 1
    %706 = vsyncpa %s705, 1
    %707 = vsyncpa [#allocation5], 1

</llo_original>
